<compile_context>
chip_gen: v5e
topology: v5e:2x2
jax: 0.10.0
libtpu: 0.0.40
codegen_flags: <defaults>
</compile_context>

<pallas_src>
import jax
import jax.numpy as jnp
from jax.experimental import pallas as pl
from jax.experimental.pallas import tpu as pltpu

_LANES = 128
_SUBLANES = 8


def _cdiv(a, b):
    return -(-a // b)


def _round_up(a, b):
    return _cdiv(a, b) * b


def _rec_losses_kernel(x_ref, l_ref, prior_ref, lam_ref, acc_ref):
    """Grid = (num_splits, blocks_per_split).

    x_ref   : (block_rows, 128) lane-dense slab of x (streamed, zero padded)
    l_ref   : (l_rows, 128)     lane-dense slab of l (VMEM-resident)
    prior_ref, lam_ref : (1, 128) lane-partial sums for this split
    acc_ref : (block_rows, 128) f32 VMEM accumulator
    """
    i = pl.program_id(1)
    last = pl.num_programs(1) - 1

    @pl.when(i == 0)
    def _init():
        acc_ref[...] = jnp.zeros_like(acc_ref)

    # relu(x - 1)^2 + relu(-1 - x)^2 == max(|x| - 1, 0)^2   (fused, pure VPU)
    x = x_ref[...]
    a = jnp.maximum(jnp.abs(x) - 1.0, 0.0)
    acc_ref[...] += a * a

    @pl.when(i == last)
    def _finalize():
        # Sublane-only reductions to lane-dense (1, 128) outputs; the cheap
        # cross-lane reduce and the 1.2 scale are done in the wrapper.
        prior_ref[...] = jnp.sum(acc_ref[...], axis=0, keepdims=True)
        nl = jnp.maximum(-l_ref[...], 0.0)
        lam_ref[...] = jnp.sum(nl * nl, axis=0, keepdims=True)


def rec_losses_pallas(x, l, *, target_block_bytes=4 * 1024 * 1024, num_splits=2):
    """Compute (prior_loss, lambda_loss) with a Pallas TPU kernel.

    x: (N, D) learned points.   l: (N,) learned KKT multipliers.
    """
    x = jnp.asarray(x, jnp.float32)
    l = jnp.asarray(l, jnp.float32)

    # ---- lane-dense repack of x: (N, D) -> (rows, 128), zero padded ---------
    total = x.size
    rows = _round_up(_cdiv(total, _LANES), _SUBLANES)
    xf = jnp.pad(x.reshape(-1), (0, rows * _LANES - total))  # pad=0 -> no loss

    # ---- streamed block size: ~target_block_bytes, multiple of 8 rows -------
    block_rows = (target_block_bytes // (_LANES * 4) // _SUBLANES) * _SUBLANES
    block_rows = max(_SUBLANES, min(rows, block_rows))
    n_blocks = _cdiv(rows, block_rows)
    if n_blocks < num_splits:
        num_splits = 1
    n_blocks = _round_up(n_blocks, num_splits)
    rows_final = n_blocks * block_rows
    if rows_final * _LANES > xf.size:
        xf = jnp.pad(xf, (0, rows_final * _LANES - xf.size))
    x2d = xf.reshape(rows_final, _LANES)
    blocks_per_split = n_blocks // num_splits

    # ---- lane-dense repack of l (small; fully VMEM-resident) ----------------
    l_total = l.size
    l_rows = _round_up(_cdiv(l_total, _LANES), _SUBLANES)
    l2d = jnp.pad(l.reshape(-1), (0, l_rows * _LANES - l_total)).reshape(l_rows, _LANES)

    grid = (num_splits, blocks_per_split)

    prior_out, lam_out = pl.pallas_call(
        _rec_losses_kernel,
        out_shape=(
            jax.ShapeDtypeStruct((1, num_splits * _LANES), jnp.float32),
            jax.ShapeDtypeStruct((1, num_splits * _LANES), jnp.float32),
        ),
        grid_spec=pltpu.PrefetchScalarGridSpec(
            num_scalar_prefetch=0,
            grid=grid,
            in_specs=[
                pl.BlockSpec((block_rows, _LANES),
                             lambda p, i: (p * blocks_per_split + i, 0)),
                pl.BlockSpec((l_rows, _LANES), lambda p, i: (0, 0)),
            ],
            out_specs=(
                pl.BlockSpec((1, _LANES), lambda p, i: (0, p)),
                pl.BlockSpec((1, _LANES), lambda p, i: (0, p)),
            ),
            scratch_shapes=[pltpu.VMEM((block_rows, _LANES), jnp.float32)],
        ),
        compiler_params=pltpu.CompilerParams(
            dimension_semantics=("parallel", "arbitrary"),
            vmem_limit_bytes=32 * 1024 * 1024,
        ),
    )(x2d, l2d)

    # Final tiny reductions in the wrapper (cross-lane + cross-split).
    prior_loss = 1.2 * jnp.sum(prior_out)
    # Every split computes the full lambda loss (l is resident); take split 0.
    lambda_loss = jnp.sum(lam_out[:, :_LANES])
    return prior_loss, lambda_loss


def rec_network_forward(x, l, rec_loss_reg=1.0, prior_loss_reg=0.0,
                        lambda_loss_reg=0.5, kkt_loss_value=0.0, **kwargs):
    """Mirror of RecNetwork.forward.

    kkt_loss_value stands in for kkt_loss(x, y, l) (external KKTLoss class).
    """
    prior_loss, lambda_loss = rec_losses_pallas(x, l, **kwargs)
    return (kkt_loss_value * rec_loss_reg
            + prior_loss * prior_loss_reg
            + lambda_loss * lambda_loss_reg)


def _reference_losses(x, l):
    up = jnp.maximum(x - 1.0, 0.0)
    lo = jnp.maximum(-1.0 - x, 0.0)
    prior = 1.2 * jnp.sum(up * up) + 1.2 * jnp.sum(lo * lo)
    lam = jnp.sum(jnp.maximum(-l, 0.0) ** 2)
    return prior, lam


if __name__ == "__main__":
    key = jax.random.PRNGKey(0)
    kx, kl, kx2, kl2 = jax.random.split(key, 4)

    # Case 1: shapes the module implies (N 2-D points, N KKT multipliers).
    N, D = 16, 2
    x = jax.random.normal(kx, (N, D), dtype=jnp.float32) * 1.5
    l = 0.001 * jnp.ones((N,), dtype=jnp.float32) \
        + 0.05 * jax.random.normal(kl, (N,), dtype=jnp.float32)

    loss = rec_network_forward(x, l, rec_loss_reg=1.0,
                               prior_loss_reg=1.0, lambda_loss_reg=0.5)
    loss = jax.block_until_ready(loss)

    prior_ref, lam_ref = _reference_losses(x, l)
    loss_ref = 0.0 * 1.0 + prior_ref * 1.0 + lam_ref * 0.5
    assert jnp.allclose(loss, loss_ref, rtol=1e-4, atol=1e-5), (loss, loss_ref)

    # Case 2: still small data, but a tiny artificial block size to exercise
    # the multi-block + 2-split (megacore) grid path.
    N2, D2 = 4096, 2
    x2 = jax.random.normal(kx2, (N2, D2), dtype=jnp.float32) * 1.3
    l2 = 0.05 * jax.random.normal(kl2, (N2,), dtype=jnp.float32)
    p2, lam2 = rec_losses_pallas(x2, l2, target_block_bytes=4096)
    p2, lam2 = jax.block_until_ready((p2, lam2))
    p2_ref, lam2_ref = _reference_losses(x2, l2)
    assert jnp.allclose(p2, p2_ref, rtol=1e-4, atol=1e-5), (p2, p2_ref)
    assert jnp.allclose(lam2, lam2_ref, rtol=1e-4, atol=1e-5), (lam2, lam2_ref)

    print("KERNEL_OK")
</pallas_src>

<mosaic_0001>
module attributes {stable_mosaic.version = 11 : i64} {
  func.func @_rec_losses_kernel(%arg0: i32, %arg1: i32, %arg2: memref<8x128xf32, #tpu.memory_space<vmem>>, %arg3: memref<8x128xf32, #tpu.memory_space<vmem>>, %arg4: memref<1x128xf32, #tpu.memory_space<vmem>>, %arg5: memref<1x128xf32, #tpu.memory_space<vmem>>, %arg6: memref<8x128xf32, #tpu.memory_space<vmem>>) attributes {dimension_semantics = [#tpu.dimension_semantics<parallel>, #tpu.dimension_semantics<arbitrary>], iteration_bounds = array<i64: 1, 1>, scalar_prefetch = 0 : i64, scratch_operands = 1 : i64, tpu.core_type = #tpu.core_type<tc>, window_params = [{transform_indices = @transform_0, window_bounds = array<i64: 8, 128>}, {pipeline_mode = #tpu.pipeline_mode<synchronous>, transform_indices = @transform_1, window_bounds = array<i64: 8, 128>}, {transform_indices = @transform_2, window_bounds = array<i64: 1, 128>}, {transform_indices = @transform_3, window_bounds = array<i64: 1, 128>}]} {
    %c0_i32 = arith.constant 0 : i32
    %0 = arith.cmpi eq, %arg1, %c0_i32 : i32
    %1 = arith.extui %0 : i1 to i32
    %c0_i32_0 = arith.constant 0 : i32
    %2 = arith.cmpi ne, %1, %c0_i32_0 : i32
    scf.if %2 {
      %cst_9 = arith.constant 0.000000e+00 : f32
      %16 = vector.broadcast %cst_9 : f32 to vector<8x128xf32>
      %c0_10 = arith.constant 0 : index
      %c0_11 = arith.constant 0 : index
      %17 = vector.load %arg6[%c0_10, %c0_11] : memref<8x128xf32, #tpu.memory_space<vmem>>, vector<8x128xf32>
      tpu.vector_store %arg6[%c0_10, %c0_11], %16 {strides = array<i32>} : memref<8x128xf32, #tpu.memory_space<vmem>>, vector<8x128xf32>,
    } else {
    }
    %c0 = arith.constant 0 : index
    %c0_1 = arith.constant 0 : index
    %3 = vector.load %arg2[%c0, %c0_1] : memref<8x128xf32, #tpu.memory_space<vmem>>, vector<8x128xf32>
    %4 = math.absf %3 : vector<8x128xf32>
    %cst = arith.constant 1.000000e+00 : f32
    %5 = vector.broadcast %cst : f32 to vector<8x128xf32>
    %6 = arith.subf %4, %5 : vector<8x128xf32>
    %cst_2 = arith.constant 0.000000e+00 : f32
    %7 = vector.broadcast %cst_2 : f32 to vector<8x128xf32>
    %8 = arith.maximumf %6, %7 : vector<8x128xf32>
    %c0_3 = arith.constant 0 : index
    %c0_4 = arith.constant 0 : index
    %9 = vector.load %arg6[%c0_3, %c0_4] : memref<8x128xf32, #tpu.memory_space<vmem>>, vector<8x128xf32>
    %10 = arith.mulf %8, %8 : vector<8x128xf32>
    %11 = arith.addf %9, %10 : vector<8x128xf32>
    %c0_5 = arith.constant 0 : index
    %c0_6 = arith.constant 0 : index
    %12 = vector.load %arg6[%c0_5, %c0_6] : memref<8x128xf32, #tpu.memory_space<vmem>>, vector<8x128xf32>
    tpu.vector_store %arg6[%c0_5, %c0_6], %11 {strides = array<i32>} : memref<8x128xf32, #tpu.memory_space<vmem>>, vector<8x128xf32>,
    %c0_i32_7 = arith.constant 0 : i32
    %13 = arith.cmpi eq, %arg1, %c0_i32_7 : i32
    %14 = arith.extui %13 : i1 to i32
    %c0_i32_8 = arith.constant 0 : i32
    %15 = arith.cmpi ne, %14, %c0_i32_8 : i32
    scf.if %15 {
      %c0_9 = arith.constant 0 : index
      %c0_10 = arith.constant 0 : index
      %16 = vector.load %arg6[%c0_9, %c0_10] : memref<8x128xf32, #tpu.memory_space<vmem>>, vector<8x128xf32>
      %cst_11 = arith.constant dense<0.000000e+00> : vector<128xf32>
      %17 = vector.multi_reduction <add>, %16, %cst_11 [0] : vector<8x128xf32> to vector<128xf32>
      %18 = vector.shape_cast %17 : vector<128xf32> to vector<1x128xf32>
      %c0_12 = arith.constant 0 : index
      %c0_13 = arith.constant 0 : index
      %19 = vector.load %arg4[%c0_12, %c0_13] : memref<1x128xf32, #tpu.memory_space<vmem>>, vector<1x128xf32>
      tpu.vector_store %arg4[%c0_12, %c0_13], %18 {strides = array<i32>} : memref<1x128xf32, #tpu.memory_space<vmem>>, vector<1x128xf32>,
      %c0_14 = arith.constant 0 : index
      %c0_15 = arith.constant 0 : index
      %20 = vector.load %arg3[%c0_14, %c0_15] : memref<8x128xf32, #tpu.memory_space<vmem>>, vector<8x128xf32>
      %cst_16 = arith.constant 0.000000e+00 : f32
      %21 = vector.broadcast %cst_16 : f32 to vector<8x128xf32>
      %22 = arith.subf %21, %20 : vector<8x128xf32>
      %cst_17 = arith.constant 0.000000e+00 : f32
      %23 = vector.broadcast %cst_17 : f32 to vector<8x128xf32>
      %24 = arith.maximumf %22, %23 : vector<8x128xf32>
      %25 = arith.mulf %24, %24 : vector<8x128xf32>
      %cst_18 = arith.constant dense<0.000000e+00> : vector<128xf32>
      %26 = vector.multi_reduction <add>, %25, %cst_18 [0] : vector<8x128xf32> to vector<128xf32>
      %27 = vector.shape_cast %26 : vector<128xf32> to vector<1x128xf32>
      %c0_19 = arith.constant 0 : index
      %c0_20 = arith.constant 0 : index
      %28 = vector.load %arg5[%c0_19, %c0_20] : memref<1x128xf32, #tpu.memory_space<vmem>>, vector<1x128xf32>
      tpu.vector_store %arg5[%c0_19, %c0_20], %27 {strides = array<i32>} : memref<1x128xf32, #tpu.memory_space<vmem>>, vector<1x128xf32>,
    } else {
    }
    return
  }
  func.func @transform_0(%arg0: i32, %arg1: i32) -> (i32, i32) {
    %c1_i32 = arith.constant 1 : i32
    %0 = arith.muli %arg0, %c1_i32 : i32
    %1 = arith.addi %0, %arg1 : i32
    %c0_i32 = arith.constant 0 : i32
    %c0_i32_0 = arith.constant 0 : i32
    return %1, %c0_i32 : i32, i32
  }
  func.func @transform_1(%arg0: i32, %arg1: i32) -> (i32, i32) {
    %c0_i32 = arith.constant 0 : i32
    %c0_i32_0 = arith.constant 0 : i32
    %c0_i32_1 = arith.constant 0 : i32
    return %c0_i32, %c0_i32_0 : i32, i32
  }
  func.func @transform_2(%arg0: i32, %arg1: i32) -> (i32, i32) {
    %c0_i32 = arith.constant 0 : i32
    %c0_i32_0 = arith.constant 0 : i32
    return %c0_i32, %arg0 : i32, i32
  }
  func.func @transform_3(%arg0: i32, %arg1: i32) -> (i32, i32) {
    %c0_i32 = arith.constant 0 : i32
    %c0_i32_0 = arith.constant 0 : i32
    return %c0_i32, %arg0 : i32, i32
  }
}

</mosaic_0001>

<llo_original>
// kernel: tpu_custom_call.1
$region0: #{tpu_custom_call.1}
  #allocation0 [shape = 'u32[]', space=smem, size = 0x4, offset = 0x4, fixed_abs, tag = 'smem constant byte address 0x4 - core index']
  #allocation1 [shape = 'u32[72,128]{1,0:T(1,128)}', space=vmem, size = 0x9000, scoped, tag = 'internal scratch']
  #allocation2 [shape = 'f32[8,128]{1,0:T(8,128)}', space=vmem, size = 0x1000, scoped, tag = 'scratch operand']
  %s0 = inlined_call_operand.hbm [shape: f32[8,128], index: 0, kind: input, shape index: {}]
  %s1 = inlined_call_operand.hbm [shape: f32[8,128], index: 1, kind: input, shape index: {}]
  %s2 = inlined_call_operand.hbm [shape: f32[1,128], index: 2, kind: output, shape index: {0}]
  %s3 = inlined_call_operand.hbm [shape: f32[1,128], index: 3, kind: output, shape index: {1}]
  %4 = xla_tuple %s2, %s3
  %s5 = sld [smem:[#allocation0]]
  $region42: #{tpu_custom_call.1} parent=0
    _
  %s7 = ssub.s32 1, %s5
  %s8 = scalar_select 0, %s7, %s5
  $region1: #{tpu_custom_call.1} parent=0
    #allocation3 [shape = 'u8[4096]{0}', space=vmem, size = 0x1000, scoped, tag = 'input window, operand 0, single buffered']
    #allocation4 [shape = 's32[1]{0}', space=sflag, size = 0x4, scoped, tag = 'scoped memory for tpu_custom_call.1']
    #allocation5 [shape = 's32[1]{0}', space=sflag, size = 0x4, scoped, tag = 'scoped memory for tpu_custom_call.1']
    #allocation6 [shape = 'u8[4096]{0}', space=vmem, size = 0x1000, scoped, tag = 'input window, operand 1, single buffered']
    #allocation7 [shape = 's32[1]{0}', space=sflag, size = 0x4, scoped, tag = 'scoped memory for tpu_custom_call.1']
    #allocation8 [shape = 'u8[512]{0}', space=vmem, size = 0x400, scoped, tag = 'output window, operand 0, single buffered']
    #allocation9 [shape = 'u8[512]{0}', space=vmem, size = 0x400, scoped, tag = 'output window, operand 1, single buffered']
    #allocation10 [shape = 's32[1]{0}', space=sflag, size = 0x4, scoped, tag = 'scoped memory for tpu_custom_call.1']
    %9 = vsyncpa [#allocation4], 0
    %10 = vsyncpa [#allocation7], 0
    %11 = vsyncpa [#allocation5], 0
    %12 = vsyncpa [#allocation10], 0
    // Predicated region
    $region2: #{tpu_custom_call.1} parent=1 // pred_check
      _
    $region3: #{tpu_custom_call.1} parent=1 // pred_check_branch
      %14 = sbr.rel (0) target = $region5
    $region4: #{tpu_custom_call.1} parent=1 // pred_region
      %s15 = sadd.s32 0, 0
      %17 = vsyncadd [#allocation4], 0
      %s18 = smul.addr %s15, 8
      %s19 = scalar_lea.hbm %s0, %s18
      %s21 = sshll.u32 %s19, 4
      %s22 = int_to_ptr.hbm [resolvable:$true] %s21
      %s23 = sshll.u32 [#allocation3], 4
      %s24 = int_to_ptr.vmem [resolvable:$true] %s23
      %26 = dma.hbm_to_vmem [thread:$0]  %s22, 128, %s24, [#allocation4]
    $region5: #{tpu_custom_call.1} parent=1 // pred_fallthru
      _
    // Predicated region
    $region6: #{tpu_custom_call.1} parent=1 // pred_check
      _
    $region7: #{tpu_custom_call.1} parent=1 // pred_check_branch
      %28 = sbr.rel (0) target = $region9
    $region8: #{tpu_custom_call.1} parent=1 // pred_region
      %30 = vsyncadd [#allocation7], 0
      %s32 = sshll.u32 %s1, 4
      %s33 = int_to_ptr.hbm [resolvable:$true] %s32
      %s34 = sshll.u32 [#allocation6], 4
      %s35 = int_to_ptr.vmem [resolvable:$true] %s34
      %37 = dma.hbm_to_vmem [thread:$0]  %s33, 128, %s35, [#allocation7]
    $region9: #{tpu_custom_call.1} parent=1 // pred_fallthru
      _
    // Predicated region
    $region10: #{tpu_custom_call.1} parent=1 // pred_check
      _
    $region11: #{tpu_custom_call.1} parent=1 // pred_check_branch
      %39 = sbr.rel (0) target = $region13
    $region12: #{tpu_custom_call.1} parent=1 // pred_region
      %41 = dma.done [#allocation4], 128
    $region13: #{tpu_custom_call.1} parent=1 // pred_fallthru
      _
    // Predicated region
    $region14: #{tpu_custom_call.1} parent=1 // pred_check
      _
    $region15: #{tpu_custom_call.1} parent=1 // pred_check_branch
      %43 = sbr.rel (0) target = $region17
    $region16: #{tpu_custom_call.1} parent=1 // pred_region
      %45 = dma.done [#allocation7], 128
    $region17: #{tpu_custom_call.1} parent=1 // pred_fallthru
      _
    %s46 = sadd.s32 0, 0
    %p47 = scmp.eq.s32.totalorder 0, 0
    // Predicated region
    $region18: #{tpu_custom_call.1} parent=1 // pred_check
      %p48 = pneg %p47
    $region19: #{tpu_custom_call.1} parent=1 // pred_check_branch
      %50 = sbr.rel (%p48) target = $region21
    $region20: #{tpu_custom_call.1} parent=1 // pred_region
      %51 = vst [vmem:[#allocation2] sm:$0xff] 0.0
    $region21: #{tpu_custom_call.1} parent=1 // pred_fallthru
      _
    %v52 = vld [vmem:[#allocation3] sm:$0xff]
    %v53 = vand.u32 2147483647, %v52
    %v54 = vsub.f32 %v53, 1.0
    %v55 = vmax.f32 %v54, 0.0
    %v56 = vld [vmem:[#allocation2] sm:$0xff]
    %v57 = vmul.f32 %v55, %v55
    %v58 = vadd.f32 %v56, %v57
    %59 = vst [vmem:[#allocation2] sm:$0xff] %v58
    // Predicated region
    $region22: #{tpu_custom_call.1} parent=1 // pred_check
      %p60 = pneg %p47
    $region23: #{tpu_custom_call.1} parent=1 // pred_check_branch
      %62 = sbr.rel (%p60) target = $region25
    $region24: #{tpu_custom_call.1} parent=1 // pred_region
      %v63 = vld [vmem:[#allocation2] sm:$0xff]
      %v64 = vrot.slane %v63, 4
      %v65 = vadd.f32 %v63, %v64
      %v66 = vrot.slane %v65, 2
      %v67 = vadd.f32 %v65, %v66
      %v68 = vrot.slane %v67, 1
      %v69 = vadd.f32 %v67, %v68
      %70 = vst [vmem:[#allocation8] sm:$0x1] %v69
      %v71 = vld [vmem:[#allocation6] sm:$0xff]
      %v72 = vsub.f32 0.0, %v71
      %v73 = vmax.f32 %v72, 0.0
      %v74 = vmul.f32 %v73, %v73
      %v75 = vrot.slane %v74, 4
      %v76 = vadd.f32 %v74, %v75
      %v77 = vrot.slane %v76, 2
      %v78 = vadd.f32 %v76, %v77
      %v79 = vrot.slane %v78, 1
      %v80 = vadd.f32 %v78, %v79
      %81 = vst [vmem:[#allocation9] sm:$0x1] %v80
    $region25: #{tpu_custom_call.1} parent=1 // pred_fallthru
      _
    // Predicated region
    $region26: #{tpu_custom_call.1} parent=1 // pred_check
      _
    $region27: #{tpu_custom_call.1} parent=1 // pred_check_branch
      %83 = sbr.rel (0) target = $region29
    $region28: #{tpu_custom_call.1} parent=1 // pred_region
      %85 = vsyncadd [#allocation5], 0
      %s87 = sshll.u32 [#allocation8], 4
      %s88 = int_to_ptr.vmem [resolvable:$true] %s87
      %s89 = sshll.u32 %s2, 4
      %s90 = int_to_ptr.hbm [resolvable:$true] %s89
      %92 = dma.vmem_to_hbm [thread:$0]  %s88, 16, %s90, [#allocation5]
    $region29: #{tpu_custom_call.1} parent=1 // pred_fallthru
      _
    // Predicated region
    $region30: #{tpu_custom_call.1} parent=1 // pred_check
      _
    $region31: #{tpu_custom_call.1} parent=1 // pred_check_branch
      %94 = sbr.rel (0) target = $region33
    $region32: #{tpu_custom_call.1} parent=1 // pred_region
      %96 = vsyncadd [#allocation10], 0
      %s98 = sshll.u32 [#allocation9], 4
      %s99 = int_to_ptr.vmem [resolvable:$true] %s98
      %s100 = sshll.u32 %s3, 4
      %s101 = int_to_ptr.hbm [resolvable:$true] %s100
      %103 = dma.vmem_to_hbm [thread:$0]  %s99, 16, %s101, [#allocation10]
    $region33: #{tpu_custom_call.1} parent=1 // pred_fallthru
      _
    // Predicated region
    $region34: #{tpu_custom_call.1} parent=1 // pred_check
      _
    $region35: #{tpu_custom_call.1} parent=1 // pred_check_branch
      %105 = sbr.rel (0) target = $region37
    $region36: #{tpu_custom_call.1} parent=1 // pred_region
      %107 = dma.done [#allocation5], 16
    $region37: #{tpu_custom_call.1} parent=1 // pred_fallthru
      _
    // Predicated region
    $region38: #{tpu_custom_call.1} parent=1 // pred_check
      _
    $region39: #{tpu_custom_call.1} parent=1 // pred_check_branch
      %109 = sbr.rel (0) target = $region41
    $region40: #{tpu_custom_call.1} parent=1 // pred_region
      %111 = dma.done [#allocation10], 16
    $region41: #{tpu_custom_call.1} parent=1 // pred_fallthru
      _
    %112 = vsyncpa [#allocation4], 1
    %113 = vsyncpa [#allocation7], 1
    %114 = vsyncpa [#allocation5], 1
    %115 = vsyncpa [#allocation10], 1

</llo_original>
